<compile_context>
chip_gen: v6e
topology: v6e:2x2x1
jax: 0.10.0
libtpu: 0.0.40
codegen_flags: <defaults>
</compile_context>

<pallas_src>
import functools

import jax
import jax.numpy as jnp
from jax import lax
from jax.experimental import pallas as pl
from jax.experimental.pallas import tpu as pltpu


def _round_up(x, m):
    return (x + m - 1) // m * m


def _supcon_tile_kernel(proj_ref, tgt_col_ref, tgt_row_ref, out_ref, *,
                        inv_temperature, batch, tile_rows):
    i = pl.program_id(0)
    row_start = pl.multiple_of(i * tile_rows, tile_rows)

    p_all = proj_ref[...]                                   # (Bp, Dp), VMEM resident
    # Row tile sliced from the resident matrix; fold 1/temperature into this small
    # (TM, Dp) operand instead of scaling the (TM, Bp) Gram slab.
    p_tile = proj_ref[pl.ds(row_start, tile_rows), :]
    p_tile = (p_tile.astype(jnp.float32) * inv_temperature).astype(p_all.dtype)

    # (TM, Bp) Gram slab; contract the LAST dim of both operands so the MXU consumes
    # the RHS directly (no transpose / XLU relayout).
    dot = lax.dot_general(
        p_tile, p_all,
        dimension_numbers=(((1,), (1,)), ((), ())),
        preferred_element_type=jnp.float32,
    )                                                       # (TM, Bp) float32

    tm, bp = dot.shape
    col_ids = lax.broadcasted_iota(jnp.int32, (tm, bp), 1)
    row_ids = lax.broadcasted_iota(jnp.int32, (tm, bp), 0) + row_start

    col_valid = col_ids < batch                             # real (unpadded) columns
    anchor_valid = (row_ids != col_ids) & col_valid         # off-diagonal AND real

    # Row-wise stabilizer over real columns only (matches torch.max over dim=1).
    stab = jnp.max(jnp.where(col_valid, dot, -jnp.inf), axis=1, keepdims=True)
    dot_shift = jnp.where(col_valid, dot - stab, 0.0)
    exp_dot = jnp.exp(dot_shift) + 1e-5                     # (TM, Bp)

    # Denominator: exp summed over off-diagonal real columns.
    denom = jnp.sum(jnp.where(anchor_valid, exp_dot, 0.0), axis=1, keepdims=True)

    # Positive-pair mask (same class, off-diagonal, real column) kept boolean.
    pos_mask = (tgt_col_ref[pl.ds(row_start, tile_rows), :] == tgt_row_ref[...]) \
        & anchor_valid
    cardinality = jnp.sum(jnp.where(pos_mask, 1.0, 0.0), axis=1, keepdims=True)

    # sum_pos(log(denom) - log(exp_dot)) == card*log(denom) - sum_pos(log(exp_dot));
    # avoids materializing a (TM,Bp) log_prob slab and an f32 mask slab.
    # TODO(synk): log(exp(x)+1e-5) ~= x would drop the (TM,Bp) log but is only valid
    # if the 1e-5 epsilon is removed/guarded; kept exact for reference parity.
    pos_log_sum = jnp.sum(jnp.where(pos_mask, jnp.log(exp_dot), 0.0),
                          axis=1, keepdims=True)
    per_row_sum = cardinality * jnp.log(denom) - pos_log_sum            # (TM, 1)

    row_gid = lax.broadcasted_iota(jnp.int32, (tm, 1), 0) + row_start
    valid = (cardinality > 0.0) & (row_gid < batch)         # rows kept by the reference
    per_sample = jnp.where(valid,
                           per_row_sum / jnp.where(valid, cardinality, 1.0),
                           0.0)

    tile_total = jnp.sum(per_sample)
    tile_count = jnp.sum(jnp.where(valid, 1.0, 0.0))

    # Single lane-dense partial block: sublane 0 <- tile sum, sublane 1 <- valid count.
    sub = lax.broadcasted_iota(jnp.int32, out_ref.shape, 1)
    out_ref[...] = jnp.where(sub == 0, tile_total,
                             jnp.where(sub == 1, tile_count, 0.0))


def supervised_contrastive_loss(projections, targets, temperature=0.07,
                                block_rows=None, matmul_dtype=None):
    """projections: [B, D] float, targets: [B] int labels -> scalar float32 loss.

    block_rows:   row-tile size. Default: 256 for large B (v6e MXU-friendly),
                  otherwise ~B/2 rounded to 8 so >=2 row tiles exist (v7x has 2 TCs),
                  or B rounded to 8 for tiny batches.
    matmul_dtype: optionally jnp.bfloat16 to feed the MXU bf16 operands (f32
                  accumulation); default None keeps f32 for exact reference parity.
    """
    B, D = projections.shape
    if block_rows is None:
        if B >= 512:
            block_rows = 256                        # 256-aligned tiles for v6e's 2x256 MXU
        elif B > 16:
            block_rows = _round_up(-(-B // 2), 8)   # >=2 row tiles -> both v7x cores busy
        else:
            block_rows = _round_up(max(B, 1), 8)
    tm = block_rows
    bp = _round_up(B, tm)          # padded batch (rows & columns)
    dp = _round_up(D, 128)         # lane-dense projection dim
    g = bp // tm                   # number of row tiles

    proj_p = jnp.zeros((bp, dp), jnp.float32).at[:B, :D].set(
        projections.astype(jnp.float32))
    if matmul_dtype is not None:
        proj_p = proj_p.astype(matmul_dtype)

    tgt = jnp.full((bp,), -1, dtype=jnp.int32).at[:B].set(targets.astype(jnp.int32))
    tgt_col = tgt.reshape(bp, 1)
    tgt_row = tgt.reshape(1, bp)

    kernel = functools.partial(
        _supcon_tile_kernel,
        inv_temperature=float(1.0 / temperature),
        batch=B,
        tile_rows=tm,
    )

    itemsize = jnp.dtype(proj_p.dtype).itemsize
    # Static residency: projection matrix (single copy) + targets (+ layout padding),
    # plus a generous budget for the per-tile (TM, Bp) f32 intermediates and outputs.
    resident_bytes = bp * dp * itemsize + 8 * bp * 4 + bp * 128 * 4
    slab_bytes = 8 * tm * bp * 4
    out_bytes = 2 * 2 * 8 * 128 * 4
    vmem_limit = int(min(max(resident_bytes + slab_bytes + out_bytes + (2 << 20),
                             32 << 20), 128 << 20))

    cost = pl.CostEstimate(
        flops=int(2 * bp * bp * dp),
        transcendentals=int(2 * bp * bp + 2 * bp),
        bytes_accessed=int(bp * dp * itemsize + 2 * bp * 4 + g * 8 * 128 * 4),
    )

    partials = pl.pallas_call(
        kernel,
        out_shape=jax.ShapeDtypeStruct((g, 8, 128), jnp.float32),
        grid_spec=pltpu.PrefetchScalarGridSpec(
            num_scalar_prefetch=0,
            grid=(g,),
            in_specs=[
                # Whole-array VMEM residents: single copy, no double buffering, no
                # per-step DMA. The kernel slices its row tile with pl.ds.
                pl.BlockSpec(memory_space=pltpu.MemorySpace.VMEM),   # projections (Bp, Dp)
                pl.BlockSpec(memory_space=pltpu.MemorySpace.VMEM),   # targets col (Bp, 1)
                pl.BlockSpec(memory_space=pltpu.MemorySpace.VMEM),   # targets row (1, Bp)
            ],
            out_specs=pl.BlockSpec((1, 8, 128), lambda i: (i, 0, 0)),
        ),
        compiler_params=pltpu.CompilerParams(
            dimension_semantics=("parallel",),
            vmem_limit_bytes=vmem_limit,
        ),
        cost_estimate=cost,
    )(proj_p, tgt_col, tgt_row)

    total = jnp.sum(partials[:, 0, 0])
    n_valid = jnp.sum(partials[:, 1, 0])
    # NaN when no row has a same-class partner (matches torch.mean of an empty tensor).
    return total / n_valid


def _reference_loss(projections, targets, temperature=0.07):
    """Pure-JAX reference mirroring the PyTorch forward."""
    projections = projections.astype(jnp.float32)
    dot = (projections @ projections.T) / temperature
    stab = jnp.max(dot, axis=1, keepdims=True)
    exp_dot = jnp.exp(dot - stab) + 1e-5
    mask_sim = (targets[:, None] == targets[None, :]).astype(jnp.float32)
    mask_anchor = 1.0 - jnp.eye(projections.shape[0], dtype=jnp.float32)
    mask_comb = mask_sim * mask_anchor
    card = jnp.sum(mask_comb, axis=1)
    log_prob = -jnp.log(exp_dot / jnp.sum(exp_dot * mask_anchor, axis=1, keepdims=True))
    per_sample_sum = jnp.sum(log_prob * mask_comb, axis=1)
    valid = card != 0
    per_sample = jnp.where(valid, per_sample_sum / jnp.where(valid, card, 1.0), 0.0)
    return jnp.sum(per_sample) / jnp.sum(valid.astype(jnp.float32))


if __name__ == "__main__":
    key = jax.random.PRNGKey(0)
    kp, kt, kp2, kt2 = jax.random.split(key, 4)

    # Aligned small case (exact f32 parity).
    B, D = 8, 32
    projections = jax.random.normal(kp, (B, D), dtype=jnp.float32)
    targets = jax.random.randint(kt, (B,), 0, 3, dtype=jnp.int32)
    loss = jax.block_until_ready(supervised_contrastive_loss(projections, targets))
    ref = _reference_loss(projections, targets)
    assert jnp.allclose(loss, ref, rtol=1e-4, atol=1e-3), (loss, ref)

    # Non-aligned case (exercises row/column/lane padding + masking).
    B2, D2 = 10, 20
    projections2 = jax.random.normal(kp2, (B2, D2), dtype=jnp.float32)
    targets2 = jax.random.randint(kt2, (B2,), 0, 4, dtype=jnp.int32)
    loss2 = jax.block_until_ready(supervised_contrastive_loss(projections2, targets2))
    ref2 = _reference_loss(projections2, targets2)
    assert jnp.allclose(loss2, ref2, rtol=1e-4, atol=1e-3), (loss2, ref2)

    # Opt-in bf16 MXU-operand path (f32 accumulation): higher throughput, looser numerics.
    loss_bf16 = jax.block_until_ready(
        supervised_contrastive_loss(projections, targets, matmul_dtype=jnp.bfloat16))
    assert bool(jnp.isfinite(loss_bf16)), loss_bf16

    print("KERNEL_OK")
</pallas_src>

<mosaic_0001>
module attributes {stable_mosaic.version = 11 : i64} {
  func.func @_supcon_tile_kernel(%arg0: i32, %arg1: memref<8x128xf32, #tpu.memory_space<vmem>>, %arg2: memref<8x1xi32, #tpu.memory_space<vmem>>, %arg3: memref<1x8xi32, #tpu.memory_space<vmem>>, %arg4: memref<1x8x128xf32, #tpu.memory_space<vmem>>) attributes {dimension_semantics = [#tpu.dimension_semantics<parallel>], iteration_bounds = array<i64: 1>, scalar_prefetch = 0 : i64, scratch_operands = 0 : i64, tpu.core_type = #tpu.core_type<tc>, window_params = [{pipeline_mode = #tpu.pipeline_mode<synchronous>, transform_indices = @transform_0, window_bounds = array<i64: 8, 128>}, {pipeline_mode = #tpu.pipeline_mode<synchronous>, transform_indices = @transform_1, window_bounds = array<i64: 8, 1>}, {pipeline_mode = #tpu.pipeline_mode<synchronous>, transform_indices = @transform_2, window_bounds = array<i64: 1, 8>}, {transform_indices = @transform_3, window_bounds = array<i64: 1, 8, 128>}]} {
    %c8_i32 = arith.constant 8 : i32
    %0 = arith.muli %arg0, %c8_i32 : i32
    %1 = tpu.assume_multiple %0, 8 : i32
    %c0 = arith.constant 0 : index
    %c0_0 = arith.constant 0 : index
    %2 = vector.load %arg1[%c0, %c0_0] : memref<8x128xf32, #tpu.memory_space<vmem>>, vector<8x128xf32>
    %3 = arith.index_cast %1 : i32 to index
    %c0_1 = arith.constant 0 : index
    %4 = vector.load %arg1[%3, %c0_1] : memref<8x128xf32, #tpu.memory_space<vmem>>, vector<8x128xf32>
    %cst = arith.constant 14.2857141 : f32
    %5 = vector.broadcast %cst : f32 to vector<8x128xf32>
    %6 = arith.mulf %4, %5 : vector<8x128xf32>
    %cst_2 = arith.constant dense<0.000000e+00> : vector<8x8xf32>
    %7 = tpu.matmul %6, %2, %cst_2 {dimension_numbers = #tpu.dot_dimension_numbers<[1], [1], [0], [0], [0, 0, 1, 0], [], []>} : vector<8x128xf32>, vector<8x128xf32>, vector<8x8xf32> -> vector<8x8xf32>
    %8 = tpu.iota {dimensions = array<i32: 1>} : vector<8x8xi32>
    %9 = tpu.iota {dimensions = array<i32: 0>} : vector<8x8xi32>
    %10 = vector.broadcast %1 : i32 to vector<8x8xi32>
    %11 = arith.addi %9, %10 : vector<8x8xi32>
    %c8_i32_3 = arith.constant 8 : i32
    %12 = vector.broadcast %c8_i32_3 : i32 to vector<8x8xi32>
    %13 = arith.cmpi slt, %8, %12 : vector<8x8xi32>
    %14 = arith.cmpi ne, %11, %8 : vector<8x8xi32>
    %15 = arith.andi %14, %13 : vector<8x8xi1>
    %cst_4 = arith.constant 0xFF800000 : f32
    %16 = vector.broadcast %cst_4 : f32 to vector<8x8xf32>
    %17 = arith.select %13, %7, %16 : vector<8x8xi1>, vector<8x8xf32>
    %cst_5 = arith.constant dense<0xFF800000> : vector<8xf32>
    %18 = vector.multi_reduction <maximumf>, %17, %cst_5 [1] : vector<8x8xf32> to vector<8xf32>
    %19 = vector.shape_cast %18 : vector<8xf32> to vector<8x1xf32>
    %20 = vector.broadcast %19 : vector<8x1xf32> to vector<8x8xf32>
    %21 = arith.subf %7, %20 : vector<8x8xf32>
    %cst_6 = arith.constant 0.000000e+00 : f32
    %22 = vector.broadcast %cst_6 : f32 to vector<8x8xf32>
    %23 = arith.select %13, %21, %22 : vector<8x8xi1>, vector<8x8xf32>
    %24 = math.exp %23 : vector<8x8xf32>
    %cst_7 = arith.constant 9.99999974E-6 : f32
    %25 = vector.broadcast %cst_7 : f32 to vector<8x8xf32>
    %26 = arith.addf %24, %25 : vector<8x8xf32>
    %cst_8 = arith.constant 0.000000e+00 : f32
    %27 = vector.broadcast %cst_8 : f32 to vector<8x8xf32>
    %28 = arith.select %15, %26, %27 : vector<8x8xi1>, vector<8x8xf32>
    %cst_9 = arith.constant dense<0.000000e+00> : vector<8xf32>
    %29 = vector.multi_reduction <add>, %28, %cst_9 [1] : vector<8x8xf32> to vector<8xf32>
    %30 = vector.shape_cast %29 : vector<8xf32> to vector<8x1xf32>
    %31 = arith.index_cast %1 : i32 to index
    %c0_10 = arith.constant 0 : index
    %32 = vector.load %arg2[%31, %c0_10] : memref<8x1xi32, #tpu.memory_space<vmem>>, vector<8x1xi32>
    %c0_11 = arith.constant 0 : index
    %c0_12 = arith.constant 0 : index
    %33 = vector.load %arg3[%c0_11, %c0_12] : memref<1x8xi32, #tpu.memory_space<vmem>>, vector<1x8xi32>
    %34 = vector.broadcast %32 : vector<8x1xi32> to vector<8x8xi32>
    %35 = vector.broadcast %33 : vector<1x8xi32> to vector<8x8xi32>
    %36 = arith.cmpi eq, %34, %35 : vector<8x8xi32>
    %37 = arith.andi %36, %15 : vector<8x8xi1>
    %cst_13 = arith.constant 1.000000e+00 : f32
    %cst_14 = arith.constant 0.000000e+00 : f32
    %38 = vector.broadcast %cst_13 : f32 to vector<8x8xf32>
    %39 = vector.broadcast %cst_14 : f32 to vector<8x8xf32>
    %40 = arith.select %37, %38, %39 : vector<8x8xi1>, vector<8x8xf32>
    %cst_15 = arith.constant dense<0.000000e+00> : vector<8xf32>
    %41 = vector.multi_reduction <add>, %40, %cst_15 [1] : vector<8x8xf32> to vector<8xf32>
    %42 = vector.shape_cast %41 : vector<8xf32> to vector<8x1xf32>
    %43 = math.log %26 : vector<8x8xf32>
    %cst_16 = arith.constant 0.000000e+00 : f32
    %44 = vector.broadcast %cst_16 : f32 to vector<8x8xf32>
    %45 = arith.select %37, %43, %44 : vector<8x8xi1>, vector<8x8xf32>
    %cst_17 = arith.constant dense<0.000000e+00> : vector<8xf32>
    %46 = vector.multi_reduction <add>, %45, %cst_17 [1] : vector<8x8xf32> to vector<8xf32>
    %47 = vector.shape_cast %46 : vector<8xf32> to vector<8x1xf32>
    %48 = math.log %30 : vector<8x1xf32>
    %49 = arith.mulf %42, %48 : vector<8x1xf32>
    %50 = arith.subf %49, %47 : vector<8x1xf32>
    %51 = tpu.iota {dimensions = array<i32: 0>} : vector<8x1xi32>
    %52 = vector.broadcast %1 : i32 to vector<8x1xi32>
    %53 = arith.addi %51, %52 : vector<8x1xi32>
    %cst_18 = arith.constant 0.000000e+00 : f32
    %54 = vector.broadcast %cst_18 : f32 to vector<8x1xf32>
    %55 = arith.cmpf ogt, %42, %54 : vector<8x1xf32>
    %c8_i32_19 = arith.constant 8 : i32
    %56 = vector.broadcast %c8_i32_19 : i32 to vector<8x1xi32>
    %57 = arith.cmpi slt, %53, %56 : vector<8x1xi32>
    %58 = arith.andi %55, %57 : vector<8x1xi1>
    %cst_20 = arith.constant 1.000000e+00 : f32
    %59 = vector.broadcast %cst_20 : f32 to vector<8x1xf32>
    %60 = arith.select %58, %42, %59 : vector<8x1xi1>, vector<8x1xf32>
    %61 = arith.divf %50, %60 : vector<8x1xf32>
    %cst_21 = arith.constant 0.000000e+00 : f32
    %62 = vector.broadcast %cst_21 : f32 to vector<8x1xf32>
    %63 = arith.select %58, %61, %62 : vector<8x1xi1>, vector<8x1xf32>
    %64 = vector.shape_cast %63 : vector<8x1xf32> to vector<1x8x1xf32>
    %cst_22 = arith.constant dense<0.000000e+00> : vector<1xf32>
    %65 = vector.multi_reduction <add>, %64, %cst_22 [1, 2] : vector<1x8x1xf32> to vector<1xf32>
    %66 = vector.shape_cast %65 : vector<1xf32> to vector<1x1x1xf32>
    %67 = vector.extract %66[0, 0, 0] : f32 from vector<1x1x1xf32>
    %cst_23 = arith.constant 1.000000e+00 : f32
    %cst_24 = arith.constant 0.000000e+00 : f32
    %68 = vector.broadcast %cst_23 : f32 to vector<8x1xf32>
    %69 = vector.broadcast %cst_24 : f32 to vector<8x1xf32>
    %70 = arith.select %58, %68, %69 : vector<8x1xi1>, vector<8x1xf32>
    %71 = vector.shape_cast %70 : vector<8x1xf32> to vector<1x8x1xf32>
    %cst_25 = arith.constant dense<0.000000e+00> : vector<1xf32>
    %72 = vector.multi_reduction <add>, %71, %cst_25 [1, 2] : vector<1x8x1xf32> to vector<1xf32>
    %73 = vector.shape_cast %72 : vector<1xf32> to vector<1x1x1xf32>
    %74 = vector.extract %73[0, 0, 0] : f32 from vector<1x1x1xf32>
    %75 = tpu.iota {dimensions = array<i32: 1>} : vector<1x8x128xi32>
    %c0_i32 = arith.constant 0 : i32
    %76 = vector.broadcast %c0_i32 : i32 to vector<1x8x128xi32>
    %77 = arith.cmpi eq, %75, %76 : vector<1x8x128xi32>
    %c1_i32 = arith.constant 1 : i32
    %78 = vector.broadcast %c1_i32 : i32 to vector<1x8x128xi32>
    %79 = arith.cmpi eq, %75, %78 : vector<1x8x128xi32>
    %cst_26 = arith.constant 0.000000e+00 : f32
    %80 = vector.broadcast %74 : f32 to vector<1x8x128xf32>
    %81 = vector.broadcast %cst_26 : f32 to vector<1x8x128xf32>
    %82 = arith.select %79, %80, %81 : vector<1x8x128xi1>, vector<1x8x128xf32>
    %83 = vector.broadcast %67 : f32 to vector<1x8x128xf32>
    %84 = arith.select %77, %83, %82 : vector<1x8x128xi1>, vector<1x8x128xf32>
    %c0_27 = arith.constant 0 : index
    %c0_28 = arith.constant 0 : index
    %c0_29 = arith.constant 0 : index
    %85 = vector.load %arg4[%c0_27, %c0_28, %c0_29] : memref<1x8x128xf32, #tpu.memory_space<vmem>>, vector<1x8x128xf32>
    tpu.vector_store %arg4[%c0_27, %c0_28, %c0_29], %84 {strides = array<i32>} : memref<1x8x128xf32, #tpu.memory_space<vmem>>, vector<1x8x128xf32>,
    return
  }
  func.func @transform_0(%arg0: i32) -> (i32, i32) {
    %c0_i32 = arith.constant 0 : i32
    %c0_i32_0 = arith.constant 0 : i32
    %c0_i32_1 = arith.constant 0 : i32
    return %c0_i32, %c0_i32_0 : i32, i32
  }
  func.func @transform_1(%arg0: i32) -> (i32, i32) {
    %c0_i32 = arith.constant 0 : i32
    %c0_i32_0 = arith.constant 0 : i32
    %c0_i32_1 = arith.constant 0 : i32
    return %c0_i32, %c0_i32_0 : i32, i32
  }
  func.func @transform_2(%arg0: i32) -> (i32, i32) {
    %c0_i32 = arith.constant 0 : i32
    %c0_i32_0 = arith.constant 0 : i32
    %c0_i32_1 = arith.constant 0 : i32
    return %c0_i32, %c0_i32_0 : i32, i32
  }
  func.func @transform_3(%arg0: i32) -> (i32, i32, i32) {
    %c0_i32 = arith.constant 0 : i32
    %c0_i32_0 = arith.constant 0 : i32
    %c0_i32_1 = arith.constant 0 : i32
    return %arg0, %c0_i32, %c0_i32_0 : i32, i32, i32
  }
}

</mosaic_0001>

<llo_original>
// kernel: tpu_custom_call.1
$region0: #{tpu_custom_call.1}
  #allocation0 [shape = 'u32[]', space=smem, size = 0x4, offset = 0x4, fixed_abs, tag = 'smem constant byte address 0x4 - core index']
  #allocation1 [shape = 'u32[144,128]{1,0:T(1,128)}', space=vmem, size = 0x12000, scoped, tag = 'internal scratch']
  %s0 = inlined_call_operand.vmem [shape: f32[8,128], index: 0, kind: input, shape index: {}]
  %s1 = inlined_call_operand.vmem [shape: s32[8,1], index: 1, kind: input, shape index: {}]
  %s2 = inlined_call_operand.vmem [shape: s32[1,8], index: 2, kind: input, shape index: {}]
  %s3 = inlined_call_operand.hbm [shape: f32[1,8,128], index: 3, kind: output, shape index: {}]
  %s4 = sld [smem:[#allocation0]]
  $region22: #{tpu_custom_call.1} parent=0
    _
  %s6 = ssub.s32 1, %s4
  %s7 = scalar_select 0, %s6, %s4
  $region1: #{tpu_custom_call.1} parent=0
    #allocation2 [shape = 'u8[4096]{0}', space=vmem, size = 0x1000, scoped, tag = 'output window, operand 0, single buffered']
    #allocation3 [shape = 's32[1]{0}', space=sflag, size = 0x4, scoped, tag = 'scoped memory for tpu_custom_call.1']
    %8 = vsyncpa [#allocation3], 0
    // Predicated region
    $region2: #{tpu_custom_call.1} parent=1 // pred_check
      _
    $region3: #{tpu_custom_call.1} parent=1 // pred_check_branch
      %10 = sbr.rel (0) target = $region5
    $region4: #{tpu_custom_call.1} parent=1 // pred_region
      _
    $region5: #{tpu_custom_call.1} parent=1 // pred_fallthru
      _
    // Predicated region
    $region6: #{tpu_custom_call.1} parent=1 // pred_check
      _
    $region7: #{tpu_custom_call.1} parent=1 // pred_check_branch
      %12 = sbr.rel (0) target = $region9
    $region8: #{tpu_custom_call.1} parent=1 // pred_region
      _
    $region9: #{tpu_custom_call.1} parent=1 // pred_fallthru
      _
    // Predicated region
    $region10: #{tpu_custom_call.1} parent=1 // pred_check
      _
    $region11: #{tpu_custom_call.1} parent=1 // pred_check_branch
      %14 = sbr.rel (0) target = $region13
    $region12: #{tpu_custom_call.1} parent=1 // pred_region
      _
    $region13: #{tpu_custom_call.1} parent=1 // pred_fallthru
      _
    %s15 = smul.u32 0, 8
    %v16 = vld [vmem:[%s0] sm:$0xff]
    %s17 = scalar_lea.vmem %s0, %s15
    %v18 = vld [vmem:[%s17] sm:$0xff]
    %v19 = vmul.f32 %v18, 14.285714
    %20 = vmatprep.subr.mxu0 0.0
    %21 = vmatpush1.xpose.msra.mxu0 0.0
    %22 = vmatprep.subr.mxu0 0.0
    %23 = vmatpush1.xpose.msra.mxu0 0.0
    %24 = vmatprep.subr.mxu0 0.0
    %25 = vmatpush1.xpose.msra.mxu0 0.0
    %26 = vmatprep.subr.mxu0 0.0
    %27 = vmatpush1.xpose.msra.mxu0 0.0
    %28 = vmatprep.subr.mxu0 0.0
    %29 = vmatpush1.xpose.msra.mxu0 0.0
    %30 = vmatprep.subr.mxu0 0.0
    %31 = vmatpush1.xpose.msra.mxu0 0.0
    %32 = vmatprep.subr.mxu0 0.0
    %33 = vmatpush1.xpose.msra.mxu0 0.0
    %34 = vmatprep.subr.mxu0 0.0
    %35 = vmatpush1.xpose.msra.mxu0 0.0
    %36 = vmatprep.subr.mxu0 0.0
    %37 = vmatpush1.xpose.msra.mxu0 0.0
    %38 = vmatprep.subr.mxu0 0.0
    %39 = vmatpush1.xpose.msra.mxu0 0.0
    %40 = vmatprep.subr.mxu0 0.0
    %41 = vmatpush1.xpose.msra.mxu0 0.0
    %42 = vmatprep.subr.mxu0 0.0
    %43 = vmatpush1.xpose.msra.mxu0 0.0
    %44 = vmatprep.subr.mxu0 0.0
    %45 = vmatpush1.xpose.msra.mxu0 0.0
    %46 = vmatprep.subr.mxu0 0.0
    %47 = vmatpush1.xpose.msra.mxu0 0.0
    %48 = vmatprep.subr.mxu0 0.0
    %49 = vmatpush1.xpose.msra.mxu0 0.0
    %50 = vmatprep.subr.mxu0 0.0
    %51 = vmatpush1.xpose.msra.mxu0 %v16
    %52 = vmatprep.subr.mxu0 0.0
    %53 = vmatpush2.xpose.msra.mxu0 0.0
    %54 = vmatprep.subr.mxu0 0.0
    %55 = vmatpush2.xpose.msra.mxu0 0.0
    %56 = vmatprep.subr.mxu0 0.0
    %57 = vmatpush2.xpose.msra.mxu0 0.0
    %58 = vmatprep.subr.mxu0 0.0
    %59 = vmatpush2.xpose.msra.mxu0 0.0
    %60 = vmatprep.subr.mxu0 0.0
    %61 = vmatpush2.xpose.msra.mxu0 0.0
    %62 = vmatprep.subr.mxu0 0.0
    %63 = vmatpush2.xpose.msra.mxu0 0.0
    %64 = vmatprep.subr.mxu0 0.0
    %65 = vmatpush2.xpose.msra.mxu0 0.0
    %66 = vmatprep.subr.mxu0 0.0
    %67 = vmatpush2.xpose.msra.mxu0 0.0
    %68 = vmatprep.subr.mxu0 0.0
    %69 = vmatpush2.xpose.msra.mxu0 0.0
    %70 = vmatprep.subr.mxu0 0.0
    %71 = vmatpush2.xpose.msra.mxu0 0.0
    %72 = vmatprep.subr.mxu0 0.0
    %73 = vmatpush2.xpose.msra.mxu0 0.0
    %74 = vmatprep.subr.mxu0 0.0
    %75 = vmatpush2.xpose.msra.mxu0 0.0
    %76 = vmatprep.subr.mxu0 0.0
    %77 = vmatpush2.xpose.msra.mxu0 0.0
    %78 = vmatprep.subr.mxu0 0.0
    %79 = vmatpush2.xpose.msra.mxu0 0.0
    %80 = vmatprep.subr.mxu0 0.0
    %81 = vmatpush2.xpose.msra.mxu0 0.0
    %82 = vmatprep.subr.mxu0 0.0
    %83 = vmatpush2.xpose.msra.mxu0 0.0
    %84 = vmatprep.mubr.f32.mxu0 0.0
    %85 = vmatmul.mubr.f32.gmra.mxu0 %v19
    %v86 = vpop.f32.mrf.mxu0
    %v87 = vadd.f32 0.0, %v86
    %v88 = vpop.f32.mrf.mxu0
    %89 = vdwg.mxu0
    %v90 = vlaneseq
    %v91 = vand.u32 %v90, 127
    %v92 = vlaneseq
    %v93 = vshrl.u32 %v92, 7
    %v94 = vstv %s15
    %v95 = vadd.s32 %v93, %v94
    %vm96 = vcmp.lt.s32.totalorder %v91, 8
    %vm97 = vcmp.ne.s32.totalorder %v95, %v91
    %vm98 = vmand %vm97, %vm96
    %v99 = vsel %vm96, %v87, -inf
    %vm100 = vcmask 64512
    %v101 = vsel %vm100, %v99, -inf
    %102 = vmax.xlane.f32.xlu0 %v101
    %v103 = vpop.xlane.xlu0 %102
    %v104 = vsub.f32 %v87, %v103
    %v105 = vsel %vm96, %v104, 0.0
    %v106 = vmul.f32 %v105, 1.442695
    %v107 = vpow.pop %v106
    %v108 = vadd.f32 %v107, 1e-05
    %v109 = vsel %vm98, %v108, 0.0
    %v110 = vsel %vm100, %v109, 0.0
    %111 = vadd.xlane.f32.xlu0 %v110
    %v112 = vpop.xlane.xlu0 %111
    %s113 = scalar_lea.vmem %s1, %s15
    %v114 = vld [vmem:[%s113] sm:$0xff]
    %v115 = vld [vmem:[%s2] sm:$0x1]
    %116 = vset.pattern.permute.xlu0 0
    %117 = vperm.xlu0 %116, %v114
    %v118 = vpop.permute.xlu0 %117
    %v119 = vlaneseq
    %v120 = vshrl.u32 %v119, 7
    %v121 = vsub.s32 0, %v120
    %v122 = vrot.slane %v115, %v121
    %vm123 = vcmp.eq.s32.totalorder %v118, %v122
    %vm124 = vmand %vm123, %vm98
    %v125 = vsel %vm124, 1.0, 0.0
    %v126 = vsel %vm100, %v125, 0.0
    %127 = vadd.xlane.f32.xlu0 %v126
    %v128 = vpop.xlane.xlu0 %127
    %v129 = vlog2.pop %v108
    %v130 = vmul.f32 %v129, 0.6931472
    %v131 = vsel %vm124, %v130, 0.0
    %v132 = vsel %vm100, %v131, 0.0
    %133 = vadd.xlane.f32.xlu0 %v132
    %v134 = vpop.xlane.xlu0 %133
    %v135 = vlog2.pop %v112
    %v136 = vmul.f32 %v135, 0.6931472
    %v137 = vmul.f32 %v128, %v136
    %v138 = vsub.f32 %v137, %v134
    %vm139 = vcmp.gt.f32.partialorder %v128, 0.0
    %vm140 = vcmp.lt.s32.totalorder %v95, 8
    %vm141 = vmand %vm139, %vm140
    %v142 = vsel %vm141, %v128, 1.0
    %v143 = vrcp.pop %v142
    %v144 = vmul.f32 %v138, %v143
    %v145 = vsel %vm141, %v144, 0.0
    %vm146 = vcmask 7168
    %v147 = vsel %vm146, %v145, 0.0
    %148 = vadd.xlane.f32.xlu0 %v147
    %v149 = vpop.xlane.xlu0 %148
    %v150 = vrot.slane %v149, 4
    %v151 = vadd.f32 %v149, %v150
    %v152 = vrot.slane %v151, 2
    %v153 = vadd.f32 %v151, %v152
    %v154 = vrot.slane %v153, 1
    %v155 = vadd.f32 %v153, %v154
    %s156 = vtos %v155
    %v157 = vsel %vm141, 1.0, 0.0
    %v158 = vsel %vm146, %v157, 0.0
    %159 = vadd.xlane.f32.xlu0 %v158
    %v160 = vpop.xlane.xlu0 %159
    %v161 = vrot.slane %v160, 4
    %v162 = vadd.f32 %v160, %v161
    %v163 = vrot.slane %v162, 2
    %v164 = vadd.f32 %v162, %v163
    %v165 = vrot.slane %v164, 1
    %v166 = vadd.f32 %v164, %v165
    %s167 = vtos %v166
    %vm168 = vcmp.eq.s32.totalorder %v93, 0
    %vm169 = vcmp.eq.s32.totalorder %v93, 1
    %v170 = vstv %s167
    %v171 = vsel %vm169, %v170, 0.0
    %v172 = vstv %s156
    %v173 = vsel %vm168, %v172, %v171
    %174 = vst [vmem:[#allocation2] sm:$0xff] %v173
    // Predicated region
    $region14: #{tpu_custom_call.1} parent=1 // pred_check
      _
    $region15: #{tpu_custom_call.1} parent=1 // pred_check_branch
      %176 = sbr.rel (0) target = $region17
    $region16: #{tpu_custom_call.1} parent=1 // pred_region
      %s178 = ssub.s32 128, 128
      %179 = vsyncadd [#allocation3], %s178
      %s181 = sshll.u32 [#allocation2], 4
      %s182 = int_to_ptr.vmem [resolvable:$true] %s181
      %184 = dma.vmem_to_hbm [thread:$0]  %s182, 128, %s3, [#allocation3]
    $region17: #{tpu_custom_call.1} parent=1 // pred_fallthru
      _
    // Predicated region
    $region18: #{tpu_custom_call.1} parent=1 // pred_check
      _
    $region19: #{tpu_custom_call.1} parent=1 // pred_check_branch
      %186 = sbr.rel (0) target = $region21
    $region20: #{tpu_custom_call.1} parent=1 // pred_region
      %187 = dma.done [#allocation3], 128
    $region21: #{tpu_custom_call.1} parent=1 // pred_fallthru
      _
    %188 = vsyncpa [#allocation3], 1

</llo_original>
